<compile_context>
chip_gen: v7x
topology: tpu7x:2x2x1
jax: 0.10.0
libtpu: 0.0.40
codegen_flags: <defaults>
</compile_context>

<pallas_src>
import jax
import jax.numpy as jnp
from jax.experimental import pallas as pl
from jax.experimental.pallas import tpu as pltpu

HIDDEN = 15
LANES = 128
CHUNK_ROWS = 128  # rows per inner chunk -> x/acc/h live set ~48 vregs (f32)


def _round_up(a, m):
    return -(-a // m) * m


def _mlp_kernel(w1_ref, b1_ref, w2_ref, b2_ref, x_ref, o_ref):
    # x_ref/o_ref: [block_rows, 128] f32 in VMEM (batch laid out lane-dense).
    # w1_ref/b1_ref/w2_ref: [15] f32 in SMEM; b2_ref: [1] f32 in SMEM.

    # Hoist all SMEM scalar reads above the chunk loop (loop-invariant).
    w1 = [w1_ref[j] for j in range(HIDDEN)]
    b1 = [b1_ref[j] for j in range(HIDDEN)]
    w2 = [w2_ref[j] for j in range(HIDDEN)]
    b2 = b2_ref[0]

    def compute(x):
        # y = b2 + sum_j relu(x * w1[j] + b1[j]) * w2[j]   (pure VPU path)
        acc = jnp.maximum(x * w1[0] + b1[0], 0.0) * w2[0] + b2  # fold b2 in
        for j in range(1, HIDDEN):
            acc = acc + jnp.maximum(x * w1[j] + b1[j], 0.0) * w2[j]
        return acc

    br = x_ref.shape[0]
    chunk = min(CHUNK_ROWS, br)          # static; both are multiples of 8
    n_full = br // chunk
    rem = br - n_full * chunk            # static tail (multiple of 8, < chunk)

    if n_full == 1:
        o_ref[pl.ds(0, chunk), :] = compute(
            x_ref[pl.ds(0, chunk), :]).astype(o_ref.dtype)
    else:
        # Rolled loop (not fully unrolled) so the live range of each chunk's
        # temporaries is hard-bounded; per-iteration work (~1200 VALU ops)
        # dwarfs the loop overhead.
        def body(c, carry):
            r = pl.multiple_of(c * chunk, chunk)
            o_ref[pl.ds(r, chunk), :] = compute(
                x_ref[pl.ds(r, chunk), :]).astype(o_ref.dtype)
            return carry

        jax.lax.fori_loop(0, n_full, body, None)

    if rem:
        r0 = n_full * chunk
        o_ref[pl.ds(r0, rem), :] = compute(
            x_ref[pl.ds(r0, rem), :]).astype(o_ref.dtype)


def _forward_lane_dense(x2, w1v, b1v, w2v, b2v, block_rows):
    """Run the kernel on an already lane-dense [rows, 128] f32 slab.

    Callers that can keep this layout end-to-end should use this directly
    (no pad / un-pad HBM passes at all).  rows must be a multiple of
    block_rows; block_rows must be a multiple of 8.
    """
    rows, lanes = x2.shape
    smem = pl.BlockSpec(memory_space=pltpu.MemorySpace.SMEM)
    return pl.pallas_call(
        _mlp_kernel,
        out_shape=jax.ShapeDtypeStruct((rows, lanes), jnp.float32),
        grid=(rows // block_rows,),
        in_specs=[
            smem,  # w1 (resident, untiled)
            smem,  # b1
            smem,  # w2
            smem,  # b2
            pl.BlockSpec((block_rows, lanes), lambda i: (i, 0)),  # x tile
        ],
        out_specs=pl.BlockSpec((block_rows, lanes), lambda i: (i, 0)),
        compiler_params=pltpu.CompilerParams(
            dimension_semantics=("parallel",),  # batch axis -> v7x 2 TCs
        ),
    )(w1v, b1v, w2v, b2v, x2)


def neural_model_forward(x, w1, b1, w2, b2, *, block_rows=2048):
    """Forward pass of Neural_Model.

    x:  [B, 1] float32 (PyTorch nn.Linear input layout)
    w1: layer1.weight [15, 1], b1: layer1.bias [15]
    w2: layer2.weight [1, 15], b2: layer2.bias [1]
    Returns [B, 1] float32.
    """
    B = x.shape[0]
    hidden = w1.shape[0]

    # Flatten params to 1-D SMEM-friendly vectors.
    w1v = jnp.asarray(w1, jnp.float32).reshape(hidden)
    b1v = jnp.asarray(b1, jnp.float32).reshape(hidden)
    w2v = jnp.asarray(w2, jnp.float32).reshape(hidden)
    b2v = jnp.asarray(b2, jnp.float32).reshape(1)

    # Rows needed to hold B scalars lane-dense, padded to the 8-sublane tile.
    rows0 = max(8, _round_up(pl.cdiv(B, LANES), 8))
    br = min(block_rows, rows0)
    # v7x: make sure the 'parallel' axis has >=2 grid steps whenever the batch
    # is big enough to split, so the second TensorCore is not idle.
    if rows0 // br < 2 and rows0 >= 16:
        br = _round_up(pl.cdiv(rows0, 2), 8)
    rows = _round_up(rows0, br)
    total = rows * LANES

    x_flat = jnp.asarray(x, jnp.float32).reshape(B)
    if total == B:
        x2 = x_flat.reshape(rows, LANES)                    # aligned: no pad
    else:
        x2 = jnp.pad(x_flat, (0, total - B)).reshape(rows, LANES)

    out2 = _forward_lane_dense(x2, w1v, b1v, w2v, b2v, br)

    if total == B:
        return out2.reshape(B, 1)                           # aligned: no slice
    return out2.reshape(total)[:B].reshape(B, 1)


def reference_forward(x, w1, b1, w2, b2):
    h = jnp.maximum(x @ w1.T + b1, 0.0)
    return h @ w2.T + b2


if __name__ == "__main__":
    key = jax.random.PRNGKey(0)
    kx, k1, k2, k3, k4 = jax.random.split(key, 5)

    # PyTorch-shaped params: layer1.weight [15,1], layer1.bias [15],
    #                        layer2.weight [1,15], layer2.bias [1].
    w1 = jax.random.uniform(k1, (HIDDEN, 1), jnp.float32, -1.0, 1.0)
    b1 = jax.random.uniform(k2, (HIDDEN,), jnp.float32, -1.0, 1.0)
    bound = 15.0 ** -0.5
    w2 = jax.random.uniform(k3, (1, HIDDEN), jnp.float32, -bound, bound)
    b2 = jax.random.uniform(k4, (1,), jnp.float32, -bound, bound)

    # B=200: small, unaligned -> pad path, single grid step, single chunk.
    # B=70001: unaligned -> multi-step grid, chunked fori_loop + static tail.
    for B in (200, 70001):
        x = jax.random.normal(jax.random.fold_in(kx, B), (B, 1), jnp.float32)
        out = jax.block_until_ready(neural_model_forward(x, w1, b1, w2, b2))
        ref = reference_forward(x, w1, b1, w2, b2)
        assert out.shape == (B, 1), out.shape
        assert jnp.allclose(out, ref, atol=1e-5, rtol=1e-5), (B, out, ref)

    print("KERNEL_OK")
</pallas_src>

<mosaic_0001>
module attributes {stable_mosaic.version = 11 : i64} {
  func.func @_mlp_kernel(%arg0: i32, %arg1: memref<15xf32, #tpu.memory_space<smem>>, %arg2: memref<15xf32, #tpu.memory_space<smem>>, %arg3: memref<15xf32, #tpu.memory_space<smem>>, %arg4: memref<1xf32, #tpu.memory_space<smem>>, %arg5: memref<8x128xf32, #tpu.memory_space<vmem>>, %arg6: memref<8x128xf32, #tpu.memory_space<vmem>>) attributes {dimension_semantics = [#tpu.dimension_semantics<parallel>], iteration_bounds = array<i64: 1>, scalar_prefetch = 0 : i64, scratch_operands = 0 : i64, tpu.core_type = #tpu.core_type<tc>, window_params = [{transform_indices = @transform_0, window_bounds = array<i64: 15>}, {transform_indices = @transform_1, window_bounds = array<i64: 15>}, {transform_indices = @transform_2, window_bounds = array<i64: 15>}, {transform_indices = @transform_3, window_bounds = array<i64: 1>}, {transform_indices = @transform_4, window_bounds = array<i64: 8, 128>}, {transform_indices = @transform_5, window_bounds = array<i64: 8, 128>}]} {
    %c0 = arith.constant 0 : index
    %0 = memref.load %arg1[%c0] : memref<15xf32, #tpu.memory_space<smem>>
    %c1 = arith.constant 1 : index
    %1 = memref.load %arg1[%c1] : memref<15xf32, #tpu.memory_space<smem>>
    %c2 = arith.constant 2 : index
    %2 = memref.load %arg1[%c2] : memref<15xf32, #tpu.memory_space<smem>>
    %c3 = arith.constant 3 : index
    %3 = memref.load %arg1[%c3] : memref<15xf32, #tpu.memory_space<smem>>
    %c4 = arith.constant 4 : index
    %4 = memref.load %arg1[%c4] : memref<15xf32, #tpu.memory_space<smem>>
    %c5 = arith.constant 5 : index
    %5 = memref.load %arg1[%c5] : memref<15xf32, #tpu.memory_space<smem>>
    %c6 = arith.constant 6 : index
    %6 = memref.load %arg1[%c6] : memref<15xf32, #tpu.memory_space<smem>>
    %c7 = arith.constant 7 : index
    %7 = memref.load %arg1[%c7] : memref<15xf32, #tpu.memory_space<smem>>
    %c8 = arith.constant 8 : index
    %8 = memref.load %arg1[%c8] : memref<15xf32, #tpu.memory_space<smem>>
    %c9 = arith.constant 9 : index
    %9 = memref.load %arg1[%c9] : memref<15xf32, #tpu.memory_space<smem>>
    %c10 = arith.constant 10 : index
    %10 = memref.load %arg1[%c10] : memref<15xf32, #tpu.memory_space<smem>>
    %c11 = arith.constant 11 : index
    %11 = memref.load %arg1[%c11] : memref<15xf32, #tpu.memory_space<smem>>
    %c12 = arith.constant 12 : index
    %12 = memref.load %arg1[%c12] : memref<15xf32, #tpu.memory_space<smem>>
    %c13 = arith.constant 13 : index
    %13 = memref.load %arg1[%c13] : memref<15xf32, #tpu.memory_space<smem>>
    %c14 = arith.constant 14 : index
    %14 = memref.load %arg1[%c14] : memref<15xf32, #tpu.memory_space<smem>>
    %c0_0 = arith.constant 0 : index
    %15 = memref.load %arg2[%c0_0] : memref<15xf32, #tpu.memory_space<smem>>
    %c1_1 = arith.constant 1 : index
    %16 = memref.load %arg2[%c1_1] : memref<15xf32, #tpu.memory_space<smem>>
    %c2_2 = arith.constant 2 : index
    %17 = memref.load %arg2[%c2_2] : memref<15xf32, #tpu.memory_space<smem>>
    %c3_3 = arith.constant 3 : index
    %18 = memref.load %arg2[%c3_3] : memref<15xf32, #tpu.memory_space<smem>>
    %c4_4 = arith.constant 4 : index
    %19 = memref.load %arg2[%c4_4] : memref<15xf32, #tpu.memory_space<smem>>
    %c5_5 = arith.constant 5 : index
    %20 = memref.load %arg2[%c5_5] : memref<15xf32, #tpu.memory_space<smem>>
    %c6_6 = arith.constant 6 : index
    %21 = memref.load %arg2[%c6_6] : memref<15xf32, #tpu.memory_space<smem>>
    %c7_7 = arith.constant 7 : index
    %22 = memref.load %arg2[%c7_7] : memref<15xf32, #tpu.memory_space<smem>>
    %c8_8 = arith.constant 8 : index
    %23 = memref.load %arg2[%c8_8] : memref<15xf32, #tpu.memory_space<smem>>
    %c9_9 = arith.constant 9 : index
    %24 = memref.load %arg2[%c9_9] : memref<15xf32, #tpu.memory_space<smem>>
    %c10_10 = arith.constant 10 : index
    %25 = memref.load %arg2[%c10_10] : memref<15xf32, #tpu.memory_space<smem>>
    %c11_11 = arith.constant 11 : index
    %26 = memref.load %arg2[%c11_11] : memref<15xf32, #tpu.memory_space<smem>>
    %c12_12 = arith.constant 12 : index
    %27 = memref.load %arg2[%c12_12] : memref<15xf32, #tpu.memory_space<smem>>
    %c13_13 = arith.constant 13 : index
    %28 = memref.load %arg2[%c13_13] : memref<15xf32, #tpu.memory_space<smem>>
    %c14_14 = arith.constant 14 : index
    %29 = memref.load %arg2[%c14_14] : memref<15xf32, #tpu.memory_space<smem>>
    %c0_15 = arith.constant 0 : index
    %30 = memref.load %arg3[%c0_15] : memref<15xf32, #tpu.memory_space<smem>>
    %c1_16 = arith.constant 1 : index
    %31 = memref.load %arg3[%c1_16] : memref<15xf32, #tpu.memory_space<smem>>
    %c2_17 = arith.constant 2 : index
    %32 = memref.load %arg3[%c2_17] : memref<15xf32, #tpu.memory_space<smem>>
    %c3_18 = arith.constant 3 : index
    %33 = memref.load %arg3[%c3_18] : memref<15xf32, #tpu.memory_space<smem>>
    %c4_19 = arith.constant 4 : index
    %34 = memref.load %arg3[%c4_19] : memref<15xf32, #tpu.memory_space<smem>>
    %c5_20 = arith.constant 5 : index
    %35 = memref.load %arg3[%c5_20] : memref<15xf32, #tpu.memory_space<smem>>
    %c6_21 = arith.constant 6 : index
    %36 = memref.load %arg3[%c6_21] : memref<15xf32, #tpu.memory_space<smem>>
    %c7_22 = arith.constant 7 : index
    %37 = memref.load %arg3[%c7_22] : memref<15xf32, #tpu.memory_space<smem>>
    %c8_23 = arith.constant 8 : index
    %38 = memref.load %arg3[%c8_23] : memref<15xf32, #tpu.memory_space<smem>>
    %c9_24 = arith.constant 9 : index
    %39 = memref.load %arg3[%c9_24] : memref<15xf32, #tpu.memory_space<smem>>
    %c10_25 = arith.constant 10 : index
    %40 = memref.load %arg3[%c10_25] : memref<15xf32, #tpu.memory_space<smem>>
    %c11_26 = arith.constant 11 : index
    %41 = memref.load %arg3[%c11_26] : memref<15xf32, #tpu.memory_space<smem>>
    %c12_27 = arith.constant 12 : index
    %42 = memref.load %arg3[%c12_27] : memref<15xf32, #tpu.memory_space<smem>>
    %c13_28 = arith.constant 13 : index
    %43 = memref.load %arg3[%c13_28] : memref<15xf32, #tpu.memory_space<smem>>
    %c14_29 = arith.constant 14 : index
    %44 = memref.load %arg3[%c14_29] : memref<15xf32, #tpu.memory_space<smem>>
    %c0_30 = arith.constant 0 : index
    %45 = memref.load %arg4[%c0_30] : memref<1xf32, #tpu.memory_space<smem>>
    %c0_31 = arith.constant 0 : index
    %c0_32 = arith.constant 0 : index
    %46 = vector.load %arg5[%c0_31, %c0_32] : memref<8x128xf32, #tpu.memory_space<vmem>>, vector<8x128xf32>
    %47 = vector.broadcast %0 : f32 to vector<8x128xf32>
    %48 = arith.mulf %46, %47 : vector<8x128xf32>
    %49 = vector.broadcast %15 : f32 to vector<8x128xf32>
    %50 = arith.addf %48, %49 : vector<8x128xf32>
    %cst = arith.constant 0.000000e+00 : f32
    %51 = vector.broadcast %cst : f32 to vector<8x128xf32>
    %52 = arith.maximumf %50, %51 : vector<8x128xf32>
    %53 = vector.broadcast %30 : f32 to vector<8x128xf32>
    %54 = arith.mulf %52, %53 : vector<8x128xf32>
    %55 = vector.broadcast %45 : f32 to vector<8x128xf32>
    %56 = arith.addf %54, %55 : vector<8x128xf32>
    %57 = vector.broadcast %1 : f32 to vector<8x128xf32>
    %58 = arith.mulf %46, %57 : vector<8x128xf32>
    %59 = vector.broadcast %16 : f32 to vector<8x128xf32>
    %60 = arith.addf %58, %59 : vector<8x128xf32>
    %cst_33 = arith.constant 0.000000e+00 : f32
    %61 = vector.broadcast %cst_33 : f32 to vector<8x128xf32>
    %62 = arith.maximumf %60, %61 : vector<8x128xf32>
    %63 = vector.broadcast %31 : f32 to vector<8x128xf32>
    %64 = arith.mulf %62, %63 : vector<8x128xf32>
    %65 = arith.addf %56, %64 : vector<8x128xf32>
    %66 = vector.broadcast %2 : f32 to vector<8x128xf32>
    %67 = arith.mulf %46, %66 : vector<8x128xf32>
    %68 = vector.broadcast %17 : f32 to vector<8x128xf32>
    %69 = arith.addf %67, %68 : vector<8x128xf32>
    %cst_34 = arith.constant 0.000000e+00 : f32
    %70 = vector.broadcast %cst_34 : f32 to vector<8x128xf32>
    %71 = arith.maximumf %69, %70 : vector<8x128xf32>
    %72 = vector.broadcast %32 : f32 to vector<8x128xf32>
    %73 = arith.mulf %71, %72 : vector<8x128xf32>
    %74 = arith.addf %65, %73 : vector<8x128xf32>
    %75 = vector.broadcast %3 : f32 to vector<8x128xf32>
    %76 = arith.mulf %46, %75 : vector<8x128xf32>
    %77 = vector.broadcast %18 : f32 to vector<8x128xf32>
    %78 = arith.addf %76, %77 : vector<8x128xf32>
    %cst_35 = arith.constant 0.000000e+00 : f32
    %79 = vector.broadcast %cst_35 : f32 to vector<8x128xf32>
    %80 = arith.maximumf %78, %79 : vector<8x128xf32>
    %81 = vector.broadcast %33 : f32 to vector<8x128xf32>
    %82 = arith.mulf %80, %81 : vector<8x128xf32>
    %83 = arith.addf %74, %82 : vector<8x128xf32>
    %84 = vector.broadcast %4 : f32 to vector<8x128xf32>
    %85 = arith.mulf %46, %84 : vector<8x128xf32>
    %86 = vector.broadcast %19 : f32 to vector<8x128xf32>
    %87 = arith.addf %85, %86 : vector<8x128xf32>
    %cst_36 = arith.constant 0.000000e+00 : f32
    %88 = vector.broadcast %cst_36 : f32 to vector<8x128xf32>
    %89 = arith.maximumf %87, %88 : vector<8x128xf32>
    %90 = vector.broadcast %34 : f32 to vector<8x128xf32>
    %91 = arith.mulf %89, %90 : vector<8x128xf32>
    %92 = arith.addf %83, %91 : vector<8x128xf32>
    %93 = vector.broadcast %5 : f32 to vector<8x128xf32>
    %94 = arith.mulf %46, %93 : vector<8x128xf32>
    %95 = vector.broadcast %20 : f32 to vector<8x128xf32>
    %96 = arith.addf %94, %95 : vector<8x128xf32>
    %cst_37 = arith.constant 0.000000e+00 : f32
    %97 = vector.broadcast %cst_37 : f32 to vector<8x128xf32>
    %98 = arith.maximumf %96, %97 : vector<8x128xf32>
    %99 = vector.broadcast %35 : f32 to vector<8x128xf32>
    %100 = arith.mulf %98, %99 : vector<8x128xf32>
    %101 = arith.addf %92, %100 : vector<8x128xf32>
    %102 = vector.broadcast %6 : f32 to vector<8x128xf32>
    %103 = arith.mulf %46, %102 : vector<8x128xf32>
    %104 = vector.broadcast %21 : f32 to vector<8x128xf32>
    %105 = arith.addf %103, %104 : vector<8x128xf32>
    %cst_38 = arith.constant 0.000000e+00 : f32
    %106 = vector.broadcast %cst_38 : f32 to vector<8x128xf32>
    %107 = arith.maximumf %105, %106 : vector<8x128xf32>
    %108 = vector.broadcast %36 : f32 to vector<8x128xf32>
    %109 = arith.mulf %107, %108 : vector<8x128xf32>
    %110 = arith.addf %101, %109 : vector<8x128xf32>
    %111 = vector.broadcast %7 : f32 to vector<8x128xf32>
    %112 = arith.mulf %46, %111 : vector<8x128xf32>
    %113 = vector.broadcast %22 : f32 to vector<8x128xf32>
    %114 = arith.addf %112, %113 : vector<8x128xf32>
    %cst_39 = arith.constant 0.000000e+00 : f32
    %115 = vector.broadcast %cst_39 : f32 to vector<8x128xf32>
    %116 = arith.maximumf %114, %115 : vector<8x128xf32>
    %117 = vector.broadcast %37 : f32 to vector<8x128xf32>
    %118 = arith.mulf %116, %117 : vector<8x128xf32>
    %119 = arith.addf %110, %118 : vector<8x128xf32>
    %120 = vector.broadcast %8 : f32 to vector<8x128xf32>
    %121 = arith.mulf %46, %120 : vector<8x128xf32>
    %122 = vector.broadcast %23 : f32 to vector<8x128xf32>
    %123 = arith.addf %121, %122 : vector<8x128xf32>
    %cst_40 = arith.constant 0.000000e+00 : f32
    %124 = vector.broadcast %cst_40 : f32 to vector<8x128xf32>
    %125 = arith.maximumf %123, %124 : vector<8x128xf32>
    %126 = vector.broadcast %38 : f32 to vector<8x128xf32>
    %127 = arith.mulf %125, %126 : vector<8x128xf32>
    %128 = arith.addf %119, %127 : vector<8x128xf32>
    %129 = vector.broadcast %9 : f32 to vector<8x128xf32>
    %130 = arith.mulf %46, %129 : vector<8x128xf32>
    %131 = vector.broadcast %24 : f32 to vector<8x128xf32>
    %132 = arith.addf %130, %131 : vector<8x128xf32>
    %cst_41 = arith.constant 0.000000e+00 : f32
    %133 = vector.broadcast %cst_41 : f32 to vector<8x128xf32>
    %134 = arith.maximumf %132, %133 : vector<8x128xf32>
    %135 = vector.broadcast %39 : f32 to vector<8x128xf32>
    %136 = arith.mulf %134, %135 : vector<8x128xf32>
    %137 = arith.addf %128, %136 : vector<8x128xf32>
    %138 = vector.broadcast %10 : f32 to vector<8x128xf32>
    %139 = arith.mulf %46, %138 : vector<8x128xf32>
    %140 = vector.broadcast %25 : f32 to vector<8x128xf32>
    %141 = arith.addf %139, %140 : vector<8x128xf32>
    %cst_42 = arith.constant 0.000000e+00 : f32
    %142 = vector.broadcast %cst_42 : f32 to vector<8x128xf32>
    %143 = arith.maximumf %141, %142 : vector<8x128xf32>
    %144 = vector.broadcast %40 : f32 to vector<8x128xf32>
    %145 = arith.mulf %143, %144 : vector<8x128xf32>
    %146 = arith.addf %137, %145 : vector<8x128xf32>
    %147 = vector.broadcast %11 : f32 to vector<8x128xf32>
    %148 = arith.mulf %46, %147 : vector<8x128xf32>
    %149 = vector.broadcast %26 : f32 to vector<8x128xf32>
    %150 = arith.addf %148, %149 : vector<8x128xf32>
    %cst_43 = arith.constant 0.000000e+00 : f32
    %151 = vector.broadcast %cst_43 : f32 to vector<8x128xf32>
    %152 = arith.maximumf %150, %151 : vector<8x128xf32>
    %153 = vector.broadcast %41 : f32 to vector<8x128xf32>
    %154 = arith.mulf %152, %153 : vector<8x128xf32>
    %155 = arith.addf %146, %154 : vector<8x128xf32>
    %156 = vector.broadcast %12 : f32 to vector<8x128xf32>
    %157 = arith.mulf %46, %156 : vector<8x128xf32>
    %158 = vector.broadcast %27 : f32 to vector<8x128xf32>
    %159 = arith.addf %157, %158 : vector<8x128xf32>
    %cst_44 = arith.constant 0.000000e+00 : f32
    %160 = vector.broadcast %cst_44 : f32 to vector<8x128xf32>
    %161 = arith.maximumf %159, %160 : vector<8x128xf32>
    %162 = vector.broadcast %42 : f32 to vector<8x128xf32>
    %163 = arith.mulf %161, %162 : vector<8x128xf32>
    %164 = arith.addf %155, %163 : vector<8x128xf32>
    %165 = vector.broadcast %13 : f32 to vector<8x128xf32>
    %166 = arith.mulf %46, %165 : vector<8x128xf32>
    %167 = vector.broadcast %28 : f32 to vector<8x128xf32>
    %168 = arith.addf %166, %167 : vector<8x128xf32>
    %cst_45 = arith.constant 0.000000e+00 : f32
    %169 = vector.broadcast %cst_45 : f32 to vector<8x128xf32>
    %170 = arith.maximumf %168, %169 : vector<8x128xf32>
    %171 = vector.broadcast %43 : f32 to vector<8x128xf32>
    %172 = arith.mulf %170, %171 : vector<8x128xf32>
    %173 = arith.addf %164, %172 : vector<8x128xf32>
    %174 = vector.broadcast %14 : f32 to vector<8x128xf32>
    %175 = arith.mulf %46, %174 : vector<8x128xf32>
    %176 = vector.broadcast %29 : f32 to vector<8x128xf32>
    %177 = arith.addf %175, %176 : vector<8x128xf32>
    %cst_46 = arith.constant 0.000000e+00 : f32
    %178 = vector.broadcast %cst_46 : f32 to vector<8x128xf32>
    %179 = arith.maximumf %177, %178 : vector<8x128xf32>
    %180 = vector.broadcast %44 : f32 to vector<8x128xf32>
    %181 = arith.mulf %179, %180 : vector<8x128xf32>
    %182 = arith.addf %173, %181 : vector<8x128xf32>
    %c0_47 = arith.constant 0 : index
    %c0_48 = arith.constant 0 : index
    %183 = vector.load %arg6[%c0_47, %c0_48] : memref<8x128xf32, #tpu.memory_space<vmem>>, vector<8x128xf32>
    tpu.vector_store %arg6[%c0_47, %c0_48], %182 {strides = array<i32>} : memref<8x128xf32, #tpu.memory_space<vmem>>, vector<8x128xf32>,
    return
  }
  func.func @transform_0(%arg0: i32) -> i32 {
    %c0_i32 = arith.constant 0 : i32
    %c0_i32_0 = arith.constant 0 : i32
    return %c0_i32 : i32
  }
  func.func @transform_1(%arg0: i32) -> i32 {
    %c0_i32 = arith.constant 0 : i32
    %c0_i32_0 = arith.constant 0 : i32
    return %c0_i32 : i32
  }
  func.func @transform_2(%arg0: i32) -> i32 {
    %c0_i32 = arith.constant 0 : i32
    %c0_i32_0 = arith.constant 0 : i32
    return %c0_i32 : i32
  }
  func.func @transform_3(%arg0: i32) -> i32 {
    %c0_i32 = arith.constant 0 : i32
    %c0_i32_0 = arith.constant 0 : i32
    return %c0_i32 : i32
  }
  func.func @transform_4(%arg0: i32) -> (i32, i32) {
    %c0_i32 = arith.constant 0 : i32
    %c0_i32_0 = arith.constant 0 : i32
    return %arg0, %c0_i32 : i32, i32
  }
  func.func @transform_5(%arg0: i32) -> (i32, i32) {
    %c0_i32 = arith.constant 0 : i32
    %c0_i32_0 = arith.constant 0 : i32
    return %arg0, %c0_i32 : i32, i32
  }
}

</mosaic_0001>

<llo_original>
// kernel: tpu_custom_call.1
$region0: #{tpu_custom_call.1}
  #allocation0 [shape = 'u32[]', space=smem, size = 0x4, offset = 0x4, fixed_abs, tag = 'smem constant byte address 0x4 - core index']
  #allocation1 [shape = 'u32[144,128]{1,0:T(1,128)}', space=vmem, size = 0x12000, scoped, tag = 'internal scratch']
  #allocation2 [shape = 'f32[1]{0:T(128)S(6)}', space=smem, size = 0x200, scoped, tag = 'scoped memory for tpu_custom_call.1']
  %s0 = inlined_call_operand.vmem [shape: f32[15], index: 0, kind: input, shape index: {}]
  %s1 = inlined_call_operand.vmem [shape: f32[15], index: 1, kind: input, shape index: {}]
  %s2 = inlined_call_operand.vmem [shape: f32[15], index: 2, kind: input, shape index: {}]
  %s3 = inlined_call_operand.<no memory space> [shape: f32[1], index: 3, kind: input, shape index: {}]
  %s4 = inlined_call_operand.vmem [shape: f32[8,128], index: 4, kind: input, shape index: {}]
  %s5 = inlined_call_operand.hbm [shape: f32[8,128], index: 5, kind: output, shape index: {}]
  %s6 = sld [smem:[#allocation0]]
  $region42: #{tpu_custom_call.1} parent=0
    _
  %s8 = ssub.s32 1, %s6
  %s9 = scalar_select 0, %s8, %s6
  %10 = sst [smem:[#allocation2]] %s3
  $region1: #{tpu_custom_call.1} parent=0
    #allocation3 [shape = 'u8[512]{0}', space=smem, size = 0x200, scoped, tag = 'input window, operand 0, single buffered']
    #allocation4 [shape = 's32[1]{0}', space=sflag, size = 0x4, scoped, tag = 'scoped memory for tpu_custom_call.1']
    #allocation5 [shape = 's32[1]{0}', space=sflag, size = 0x4, scoped, tag = 'scoped memory for tpu_custom_call.1']
    #allocation6 [shape = 'u8[512]{0}', space=smem, size = 0x200, scoped, tag = 'input window, operand 1, single buffered']
    #allocation7 [shape = 's32[1]{0}', space=sflag, size = 0x4, scoped, tag = 'scoped memory for tpu_custom_call.1']
    #allocation8 [shape = 'u8[512]{0}', space=smem, size = 0x200, scoped, tag = 'input window, operand 2, single buffered']
    #allocation9 [shape = 'u8[4096]{0}', space=vmem, size = 0x1000, scoped, tag = 'output window, operand 0, single buffered']
    %11 = vsyncpa [#allocation5], 0
    %12 = vsyncpa [#allocation7], 0
    %13 = vsyncpa [#allocation4], 0
    // Predicated region
    $region2: #{tpu_custom_call.1} parent=1 // pred_check
      _
    $region3: #{tpu_custom_call.1} parent=1 // pred_check_branch
      %15 = sbr.rel (0) target = $region5
    $region4: #{tpu_custom_call.1} parent=1 // pred_region
      %s17 = ssub.s32 16, 16
      %18 = vsyncadd [#allocation5], %s17
      %s20 = sshll.u32 %s0, 4
      %s21 = int_to_ptr.vmem [resolvable:$true] %s20
      %23 = dma.vmem_to_smem %s21, 16, [#allocation3], [#allocation5]
    $region5: #{tpu_custom_call.1} parent=1 // pred_fallthru
      _
    // Predicated region
    $region6: #{tpu_custom_call.1} parent=1 // pred_check
      _
    $region7: #{tpu_custom_call.1} parent=1 // pred_check_branch
      %25 = sbr.rel (0) target = $region9
    $region8: #{tpu_custom_call.1} parent=1 // pred_region
      %s27 = ssub.s32 16, 16
      %28 = vsyncadd [#allocation7], %s27
      %s30 = sshll.u32 %s1, 4
      %s31 = int_to_ptr.vmem [resolvable:$true] %s30
      %33 = dma.vmem_to_smem %s31, 16, [#allocation6], [#allocation7]
    $region9: #{tpu_custom_call.1} parent=1 // pred_fallthru
      _
    // Predicated region
    $region10: #{tpu_custom_call.1} parent=1 // pred_check
      _
    $region11: #{tpu_custom_call.1} parent=1 // pred_check_branch
      %35 = sbr.rel (0) target = $region13
    $region12: #{tpu_custom_call.1} parent=1 // pred_region
      %s37 = ssub.s32 16, 16
      %38 = vsyncadd [#allocation7], %s37
      %s40 = sshll.u32 %s2, 4
      %s41 = int_to_ptr.vmem [resolvable:$true] %s40
      %43 = dma.vmem_to_smem %s41, 16, [#allocation8], [#allocation7]
    $region13: #{tpu_custom_call.1} parent=1 // pred_fallthru
      _
    // Predicated region
    $region14: #{tpu_custom_call.1} parent=1 // pred_check
      _
    $region15: #{tpu_custom_call.1} parent=1 // pred_check_branch
      %45 = sbr.rel (0) target = $region17
    $region16: #{tpu_custom_call.1} parent=1 // pred_region
      _
    $region17: #{tpu_custom_call.1} parent=1 // pred_fallthru
      _
    // Predicated region
    $region18: #{tpu_custom_call.1} parent=1 // pred_check
      _
    $region19: #{tpu_custom_call.1} parent=1 // pred_check_branch
      %47 = sbr.rel (0) target = $region21
    $region20: #{tpu_custom_call.1} parent=1 // pred_region
      _
    $region21: #{tpu_custom_call.1} parent=1 // pred_fallthru
      _
    // Predicated region
    $region22: #{tpu_custom_call.1} parent=1 // pred_check
      _
    $region23: #{tpu_custom_call.1} parent=1 // pred_check_branch
      %49 = sbr.rel (0) target = $region25
    $region24: #{tpu_custom_call.1} parent=1 // pred_region
      %50 = dma.done [#allocation5], 16
    $region25: #{tpu_custom_call.1} parent=1 // pred_fallthru
      _
    // Predicated region
    $region26: #{tpu_custom_call.1} parent=1 // pred_check
      _
    $region27: #{tpu_custom_call.1} parent=1 // pred_check_branch
      %52 = sbr.rel (0) target = $region29
    $region28: #{tpu_custom_call.1} parent=1 // pred_region
      %53 = dma.done [#allocation7], 16
    $region29: #{tpu_custom_call.1} parent=1 // pred_fallthru
      _
    // Predicated region
    $region30: #{tpu_custom_call.1} parent=1 // pred_check
      _
    $region31: #{tpu_custom_call.1} parent=1 // pred_check_branch
      %55 = sbr.rel (0) target = $region33
    $region32: #{tpu_custom_call.1} parent=1 // pred_region
      %56 = dma.done [#allocation7], 16
    $region33: #{tpu_custom_call.1} parent=1 // pred_fallthru
      _
    %57 = sfence
    %s58 = sld [smem:[#allocation3]]
    %s59 = sld [smem:[#allocation3 + $0x1]]
    %s60 = sld [smem:[#allocation3 + $0x2]]
    %s61 = sld [smem:[#allocation3 + $0x3]]
    %s62 = sld [smem:[#allocation3 + $0x4]]
    %s63 = sld [smem:[#allocation3 + $0x5]]
    %s64 = sld [smem:[#allocation3 + $0x6]]
    %s65 = sld [smem:[#allocation3 + $0x7]]
    %s66 = sld [smem:[#allocation3 + $0x8]]
    %s67 = sld [smem:[#allocation3 + $0x9]]
    %s68 = sld [smem:[#allocation3 + $0xa]]
    %s69 = sld [smem:[#allocation3 + $0xb]]
    %s70 = sld [smem:[#allocation3 + $0xc]]
    %s71 = sld [smem:[#allocation3 + $0xd]]
    %s72 = sld [smem:[#allocation3 + $0xe]]
    %s73 = sld [smem:[#allocation6]]
    %s74 = sld [smem:[#allocation6 + $0x1]]
    %s75 = sld [smem:[#allocation6 + $0x2]]
    %s76 = sld [smem:[#allocation6 + $0x3]]
    %s77 = sld [smem:[#allocation6 + $0x4]]
    %s78 = sld [smem:[#allocation6 + $0x5]]
    %s79 = sld [smem:[#allocation6 + $0x6]]
    %s80 = sld [smem:[#allocation6 + $0x7]]
    %s81 = sld [smem:[#allocation6 + $0x8]]
    %s82 = sld [smem:[#allocation6 + $0x9]]
    %s83 = sld [smem:[#allocation6 + $0xa]]
    %s84 = sld [smem:[#allocation6 + $0xb]]
    %s85 = sld [smem:[#allocation6 + $0xc]]
    %s86 = sld [smem:[#allocation6 + $0xd]]
    %s87 = sld [smem:[#allocation6 + $0xe]]
    %s88 = sld [smem:[#allocation8]]
    %s89 = sld [smem:[#allocation8 + $0x1]]
    %s90 = sld [smem:[#allocation8 + $0x2]]
    %s91 = sld [smem:[#allocation8 + $0x3]]
    %s92 = sld [smem:[#allocation8 + $0x4]]
    %s93 = sld [smem:[#allocation8 + $0x5]]
    %s94 = sld [smem:[#allocation8 + $0x6]]
    %s95 = sld [smem:[#allocation8 + $0x7]]
    %s96 = sld [smem:[#allocation8 + $0x8]]
    %s97 = sld [smem:[#allocation8 + $0x9]]
    %s98 = sld [smem:[#allocation8 + $0xa]]
    %s99 = sld [smem:[#allocation8 + $0xb]]
    %s100 = sld [smem:[#allocation8 + $0xc]]
    %s101 = sld [smem:[#allocation8 + $0xd]]
    %s102 = sld [smem:[#allocation8 + $0xe]]
    %s103 = sld [smem:[#allocation2]]
    %v104 = vld [vmem:[%s4] sm:$0xff]
    %v105 = vstv %s58
    %v106 = vmul.f32 %v104, %v105
    %v107 = vstv %s73
    %v108 = vadd.f32 %v106, %v107
    %v109 = vmax.f32 %v108, 0.0
    %v110 = vstv %s88
    %v111 = vmul.f32 %v109, %v110
    %v112 = vstv %s103
    %v113 = vadd.f32 %v111, %v112
    %v114 = vstv %s59
    %v115 = vmul.f32 %v104, %v114
    %v116 = vstv %s74
    %v117 = vadd.f32 %v115, %v116
    %v118 = vmax.f32 %v117, 0.0
    %v119 = vstv %s89
    %v120 = vmul.f32 %v118, %v119
    %v121 = vadd.f32 %v113, %v120
    %v122 = vstv %s60
    %v123 = vmul.f32 %v104, %v122
    %v124 = vstv %s75
    %v125 = vadd.f32 %v123, %v124
    %v126 = vmax.f32 %v125, 0.0
    %v127 = vstv %s90
    %v128 = vmul.f32 %v126, %v127
    %v129 = vadd.f32 %v121, %v128
    %v130 = vstv %s61
    %v131 = vmul.f32 %v104, %v130
    %v132 = vstv %s76
    %v133 = vadd.f32 %v131, %v132
    %v134 = vmax.f32 %v133, 0.0
    %v135 = vstv %s91
    %v136 = vmul.f32 %v134, %v135
    %v137 = vadd.f32 %v129, %v136
    %v138 = vstv %s62
    %v139 = vmul.f32 %v104, %v138
    %v140 = vstv %s77
    %v141 = vadd.f32 %v139, %v140
    %v142 = vmax.f32 %v141, 0.0
    %v143 = vstv %s92
    %v144 = vmul.f32 %v142, %v143
    %v145 = vadd.f32 %v137, %v144
    %v146 = vstv %s63
    %v147 = vmul.f32 %v104, %v146
    %v148 = vstv %s78
    %v149 = vadd.f32 %v147, %v148
    %v150 = vmax.f32 %v149, 0.0
    %v151 = vstv %s93
    %v152 = vmul.f32 %v150, %v151
    %v153 = vadd.f32 %v145, %v152
    %v154 = vstv %s64
    %v155 = vmul.f32 %v104, %v154
    %v156 = vstv %s79
    %v157 = vadd.f32 %v155, %v156
    %v158 = vmax.f32 %v157, 0.0
    %v159 = vstv %s94
    %v160 = vmul.f32 %v158, %v159
    %v161 = vadd.f32 %v153, %v160
    %v162 = vstv %s65
    %v163 = vmul.f32 %v104, %v162
    %v164 = vstv %s80
    %v165 = vadd.f32 %v163, %v164
    %v166 = vmax.f32 %v165, 0.0
    %v167 = vstv %s95
    %v168 = vmul.f32 %v166, %v167
    %v169 = vadd.f32 %v161, %v168
    %v170 = vstv %s66
    %v171 = vmul.f32 %v104, %v170
    %v172 = vstv %s81
    %v173 = vadd.f32 %v171, %v172
    %v174 = vmax.f32 %v173, 0.0
    %v175 = vstv %s96
    %v176 = vmul.f32 %v174, %v175
    %v177 = vadd.f32 %v169, %v176
    %v178 = vstv %s67
    %v179 = vmul.f32 %v104, %v178
    %v180 = vstv %s82
    %v181 = vadd.f32 %v179, %v180
    %v182 = vmax.f32 %v181, 0.0
    %v183 = vstv %s97
    %v184 = vmul.f32 %v182, %v183
    %v185 = vadd.f32 %v177, %v184
    %v186 = vstv %s68
    %v187 = vmul.f32 %v104, %v186
    %v188 = vstv %s83
    %v189 = vadd.f32 %v187, %v188
    %v190 = vmax.f32 %v189, 0.0
    %v191 = vstv %s98
    %v192 = vmul.f32 %v190, %v191
    %v193 = vadd.f32 %v185, %v192
    %v194 = vstv %s69
    %v195 = vmul.f32 %v104, %v194
    %v196 = vstv %s84
    %v197 = vadd.f32 %v195, %v196
    %v198 = vmax.f32 %v197, 0.0
    %v199 = vstv %s99
    %v200 = vmul.f32 %v198, %v199
    %v201 = vadd.f32 %v193, %v200
    %v202 = vstv %s70
    %v203 = vmul.f32 %v104, %v202
    %v204 = vstv %s85
    %v205 = vadd.f32 %v203, %v204
    %v206 = vmax.f32 %v205, 0.0
    %v207 = vstv %s100
    %v208 = vmul.f32 %v206, %v207
    %v209 = vadd.f32 %v201, %v208
    %v210 = vstv %s71
    %v211 = vmul.f32 %v104, %v210
    %v212 = vstv %s86
    %v213 = vadd.f32 %v211, %v212
    %v214 = vmax.f32 %v213, 0.0
    %v215 = vstv %s101
    %v216 = vmul.f32 %v214, %v215
    %v217 = vadd.f32 %v209, %v216
    %v218 = vstv %s72
    %v219 = vmul.f32 %v104, %v218
    %v220 = vstv %s87
    %v221 = vadd.f32 %v219, %v220
    %v222 = vmax.f32 %v221, 0.0
    %v223 = vstv %s102
    %v224 = vmul.f32 %v222, %v223
    %v225 = vadd.f32 %v217, %v224
    %226 = vst [vmem:[#allocation9] sm:$0xff] %v225
    // Predicated region
    $region34: #{tpu_custom_call.1} parent=1 // pred_check
      _
    $region35: #{tpu_custom_call.1} parent=1 // pred_check_branch
      %228 = sbr.rel (0) target = $region37
    $region36: #{tpu_custom_call.1} parent=1 // pred_region
      %s230 = ssub.s32 128, 128
      %231 = vsyncadd [#allocation4], %s230
      %s233 = sshll.u32 [#allocation9], 4
      %s234 = int_to_ptr.vmem [resolvable:$true] %s233
      %236 = dma.vmem_to_hbm [thread:$0]  %s234, 128, %s5, [#allocation4]
    $region37: #{tpu_custom_call.1} parent=1 // pred_fallthru
      _
    // Predicated region
    $region38: #{tpu_custom_call.1} parent=1 // pred_check
      _
    $region39: #{tpu_custom_call.1} parent=1 // pred_check_branch
      %238 = sbr.rel (0) target = $region41
    $region40: #{tpu_custom_call.1} parent=1 // pred_region
      %239 = dma.done [#allocation4], 128
    $region41: #{tpu_custom_call.1} parent=1 // pred_fallthru
      _
    %240 = vsyncpa [#allocation4], 1
    %241 = vsyncpa [#allocation5], 1
    %242 = vsyncpa [#allocation7], 1

</llo_original>
